<compile_context>
chip_gen: v5e
topology: v5e:2x2
jax: 0.10.0
libtpu: 0.0.40
codegen_flags: <defaults>
</compile_context>

<pallas_src>
import functools

import jax
import jax.numpy as jnp
from jax.experimental import pallas as pl
from jax.experimental.pallas import tpu as pltpu


_LANE = 128
_TILE_QUANTUM = 256   # pad N to a multiple of this; aligns with 256x256 MXU


def _pad_to(n, q):
    return ((n + q - 1) // q) * q


def _vmem_budget():
    """(A_hat column-tile ceiling, scoped-vmem cap) per chip's physical VMEM."""
    try:
        cap = pltpu.get_tpu_info().vmem_capacity_bytes
    except Exception:  # emulator / older runtime: assume the small (v7x) part
        cap = 64 << 20
    if cap >= (128 << 20):          # v5e / v6e: 128 MiB VMEM
        return 1024, 100 << 20
    return 512, 52 << 20            # v7x: 64 MiB per TC, keep compiler headroom


def _select_tiles(n_pad, tk_ceiling):
    """A_hat tiles: tm rows (>=2 row blocks for megacore), tk cols dividing n_pad."""
    tm = 128 if n_pad <= 256 else 256
    tk = _TILE_QUANTUM
    t = _TILE_QUANTUM
    while t <= min(tk_ceiling, n_pad):
        if n_pad % t == 0:
            tk = t
        t += _TILE_QUANTUM
    return tm, tk


# ---------------------------------------------------------------------------
# Kernel 1: feature transform  XW = X @ W   (hoisted out of the A_hat loop)
# ---------------------------------------------------------------------------

def _feature_transform_kernel(x_ref, w_ref, o_ref):
    o_ref[...] = jnp.dot(
        x_ref[...], w_ref[...], preferred_element_type=jnp.float32
    ).astype(o_ref.dtype)


def feature_transform(x_bf16, w_bf16):
    n, c_in = x_bf16.shape
    c_out = w_bf16.shape[1]
    tm = _TILE_QUANTUM if n % _TILE_QUANTUM == 0 else n
    return pl.pallas_call(
        _feature_transform_kernel,
        out_shape=jax.ShapeDtypeStruct((n, c_out), jnp.bfloat16),
        grid=(n // tm,),
        in_specs=[
            pl.BlockSpec((tm, c_in), lambda i: (i, 0)),      # X rows (pipelined)
            pl.BlockSpec((c_in, c_out), lambda i: (0, 0)),   # W (resident)
        ],
        out_specs=pl.BlockSpec((tm, c_out), lambda i: (i, 0)),
        compiler_params=pltpu.CompilerParams(
            dimension_semantics=("parallel",),
        ),
    )(x_bf16, w_bf16)


# ---------------------------------------------------------------------------
# Kernel 2: block-sparse neighborhood aggregation
#           out = A_hat @ XW + b  (optional ReLU), skipping all-zero A tiles
# ---------------------------------------------------------------------------

def _aggregate_kernel(cols_ref, counts_ref, a_ref, xw_ref, b_ref, o_ref,
                      acc_ref, *, apply_relu, xw_resident, tk):
    i = pl.program_id(0)
    k = pl.program_id(1)

    @pl.when(k == 0)
    def _():
        acc_ref[...] = jnp.zeros_like(acc_ref)

    # Only accumulate for the real (non-padded) non-zero block-columns of this
    # row stripe; padded schedule entries repeat the previous block index so
    # the pipeline does not re-DMA them and the MXU work is skipped here.
    @pl.when(k < counts_ref[i])
    def _():
        if xw_resident:
            start = pl.multiple_of(cols_ref[i, k] * tk, tk)
            xw = xw_ref[pl.ds(start, tk), :]
        else:
            xw = xw_ref[...]
        acc_ref[...] += jnp.dot(
            a_ref[...], xw, preferred_element_type=jnp.float32
        )

    @pl.when(k == pl.num_programs(1) - 1)
    def _():
        out = acc_ref[...] + b_ref[...]          # bias only in the epilogue (f32)
        if apply_relu:
            out = jnp.maximum(out, 0.0)
        o_ref[...] = out.astype(o_ref.dtype)


def aggregate(a_hat, xw, b, cols, counts, max_k, tm, tk, *,
              apply_relu, out_dtype, vmem_cap):
    n_pad = a_hat.shape[0]
    c_out = xw.shape[1]
    nb_r = n_pad // tm

    # Keep XW fully VMEM-resident when it fits: removes the per-row-tile
    # re-streaming of XW from HBM and frees one double-buffer stream.
    xw_bytes = n_pad * c_out * xw.dtype.itemsize
    xw_resident = 2 * xw_bytes <= (16 << 20)

    if xw_resident:
        xw_spec = pl.BlockSpec((n_pad, c_out), lambda i, k, cols_r, cnt_r: (0, 0))
    else:
        xw_spec = pl.BlockSpec(
            (tk, c_out), lambda i, k, cols_r, cnt_r: (cols_r[i, k], 0))

    in_specs = [
        # A_hat tile: data-dependent block column from the prefetched schedule.
        pl.BlockSpec((tm, tk), lambda i, k, cols_r, cnt_r: (i, cols_r[i, k])),
        xw_spec,
        pl.BlockSpec((1, c_out), lambda i, k, cols_r, cnt_r: (0, 0)),   # bias
    ]
    out_spec = pl.BlockSpec((tm, c_out), lambda i, k, cols_r, cnt_r: (i, 0))

    # Scoped-VMEM limit from the actual footprint, capped per chip.
    a_bytes = tm * tk * a_hat.dtype.itemsize
    xw_buf = xw_bytes if xw_resident else tk * c_out * xw.dtype.itemsize
    out_bytes = tm * c_out * jnp.dtype(out_dtype).itemsize
    footprint = 2 * (a_bytes + xw_buf + out_bytes + c_out * 4) + tm * c_out * 4
    vmem_limit = int(min(vmem_cap, max(32 << 20, footprint * 3 // 2)))

    kernel = functools.partial(_aggregate_kernel, apply_relu=apply_relu,
                               xw_resident=xw_resident, tk=tk)
    return pl.pallas_call(
        kernel,
        out_shape=jax.ShapeDtypeStruct((n_pad, c_out), out_dtype),
        grid_spec=pltpu.PrefetchScalarGridSpec(
            num_scalar_prefetch=2,
            grid=(nb_r, max_k),
            in_specs=in_specs,
            out_specs=out_spec,
            scratch_shapes=[pltpu.VMEM((tm, c_out), jnp.float32)],
        ),
        compiler_params=pltpu.CompilerParams(
            dimension_semantics=("parallel", "arbitrary"),
            vmem_limit_bytes=vmem_limit,
        ),
    )(cols, counts, a_hat, xw, b)


# ---------------------------------------------------------------------------
# Graph normalization + block-sparse schedule (plain-JAX glue)
# ---------------------------------------------------------------------------

def normalized_adjacency(edge_index, edge_weight, num_nodes):
    """Dense GCN-normalized adjacency A_hat[col, row] (PyG gcn_norm semantics).

    Matches add_remaining_self_loops: a weight-1 self-loop is added only to
    nodes that do not already have one; existing self-loops are kept as-is.
    """
    row, col = edge_index[0], edge_index[1]
    w = edge_weight.astype(jnp.float32)
    # adj[c, r] = total weight of edges r -> c (duplicate edges coalesced).
    adj = jnp.zeros((num_nodes, num_nodes), jnp.float32).at[col, row].add(w)
    has_loop = (jnp.zeros((num_nodes,), jnp.float32)
                .at[col].add(jnp.where(row == col, 1.0, 0.0))) > 0
    adj = adj + jnp.diag(jnp.where(has_loop, 0.0, 1.0))
    deg = adj.sum(axis=1)                         # in-degree at target (col)
    dis = jnp.where(deg > 0, jax.lax.rsqrt(deg), 0.0)
    return dis[:, None] * adj * dis[None, :]


def _block_sparse_schedule(a_pad, tm, tk):
    """Per-row-tile nonzero block-column schedule for the aggregate kernel.

    Returns (cols [nb_r, max_k] int32, counts [nb_r] int32, max_k). Padded
    entries repeat the last valid column so the pipeline never re-fetches
    them; compute is gated with pl.when(k < counts[i]) in the kernel.
    NOTE: max_k is pulled back to the host -> compute this once per graph
    structure, outside jit.
    """
    n_pad = a_pad.shape[0]
    nb_r, nb_c = n_pad // tm, n_pad // tk
    blk = (a_pad.reshape(nb_r, tm, nb_c, tk) != 0.0).any(axis=(1, 3))
    counts = blk.sum(axis=1).astype(jnp.int32)
    order = jnp.argsort(jnp.logical_not(blk), axis=1).astype(jnp.int32)
    last_valid = jnp.take_along_axis(
        order, jnp.maximum(counts - 1, 0)[:, None], axis=1)
    k_idx = jnp.arange(nb_c, dtype=jnp.int32)[None, :]
    cols = jnp.where(k_idx < counts[:, None], order, last_valid)
    max_k = max(int(counts.max()), 1)
    return cols[:, :max_k], counts, max_k


# ---------------------------------------------------------------------------
# Encoder params + forward
# ---------------------------------------------------------------------------

def init_gcn_encoder_params(key, in_node_dim, out_node_dim, n_layers):
    """Deterministic glorot-uniform weights, zero biases (GCNConv defaults)."""
    assert n_layers > 0
    channel_nums = [in_node_dim]
    channel_nums += [2 ** (n_layers - 1 - i) * out_node_dim for i in range(n_layers - 1)]
    channel_nums += [out_node_dim]
    params = []
    for c_in, c_out in zip(channel_nums[:-1], channel_nums[1:]):
        key, sub = jax.random.split(key)
        bound = (6.0 / (c_in + c_out)) ** 0.5
        w = jax.random.uniform(
            sub, (c_in, c_out), minval=-bound, maxval=bound, dtype=jnp.float32)
        b = jnp.zeros((1, c_out), jnp.float32)
        params.append((w, b))
    return params


def gcn_encoder_forward(params, x, edge_index, edge_weight, num_graphs, out_node_dim):
    n = x.shape[0]
    a_hat = normalized_adjacency(edge_index, edge_weight, n)

    tk_ceiling, vmem_cap = _vmem_budget()
    n_pad = _pad_to(n, _TILE_QUANTUM)
    tm, tk = _select_tiles(n_pad, tk_ceiling)

    # Zero-pad the node dimension so tiles divide exactly (no full-extent
    # fallback), then build the block-sparse schedule at (tm, tk) granularity.
    a_pad = jnp.zeros((n_pad, n_pad), jnp.float32).at[:n, :n].set(a_hat)
    cols, counts, max_k = _block_sparse_schedule(a_pad, tm, tk)
    # bf16 halves the dominant N^2 HBM stream; accumulation stays f32 in VMEM.
    # TODO(synk): on v7x, store A_hat in fp8 (e4m3) for another ~2x on the
    # dominant stream (entries are in [0,1]); validate accuracy first.
    a_bf16 = a_pad.astype(jnp.bfloat16)

    h = jnp.zeros((n_pad, x.shape[1]), jnp.bfloat16).at[:n].set(
        x.astype(jnp.bfloat16))

    n_layers = len(params)
    for li, (w, b) in enumerate(params):
        is_last = li == n_layers - 1
        c_in, c_out = w.shape
        c_out_pad = _pad_to(c_out, _LANE)
        # Zero-padded weights/bias keep every accumulator/output vreg lane-dense.
        w_p = (jnp.zeros((h.shape[1], c_out_pad), jnp.bfloat16)
               .at[:c_in, :c_out].set(w.astype(jnp.bfloat16)))
        b_p = jnp.zeros((1, c_out_pad), jnp.float32).at[:, :c_out].set(b)

        xw = feature_transform(h, w_p)            # hoisted out of the A_hat loop
        h = aggregate(a_bf16, xw, b_p, cols, counts, max_k, tm, tk,
                      apply_relu=not is_last,
                      out_dtype=jnp.float32 if is_last else jnp.bfloat16,
                      vmem_cap=vmem_cap)

    h = h[:n, :out_node_dim]
    graph_embed = h.reshape(num_graphs, -1, out_node_dim)
    graph_embed = jnp.concatenate(
        [graph_embed,
         jnp.zeros((num_graphs, 1, out_node_dim), graph_embed.dtype)],
        axis=1,
    )
    return graph_embed


if __name__ == "__main__":
    key = jax.random.PRNGKey(0)
    num_graphs = 2
    nodes_per_graph = 8
    num_nodes = num_graphs * nodes_per_graph
    in_node_dim = 4
    out_node_dim = 8
    n_layers = 3
    num_edges = 32

    k_edges, k_w, k_x, k_params = jax.random.split(key, 4)
    edge_index = jax.random.randint(
        k_edges, (2, num_edges), 0, num_nodes, dtype=jnp.int32)
    edge_weight = jax.random.uniform(
        k_w, (num_edges,), minval=0.5, maxval=1.5, dtype=jnp.float32)
    x = jax.random.normal(k_x, (num_nodes, in_node_dim), dtype=jnp.float32)

    params = init_gcn_encoder_params(k_params, in_node_dim, out_node_dim, n_layers)

    graph_embed = gcn_encoder_forward(
        params, x, edge_index, edge_weight, num_graphs, out_node_dim
    )
    jax.block_until_ready(graph_embed)
    assert graph_embed.shape == (num_graphs, nodes_per_graph + 1, out_node_dim)
    print("KERNEL_OK")
</pallas_src>

<mosaic_0001>
module attributes {stable_mosaic.version = 11 : i64} {
  func.func @_feature_transform_kernel(%arg0: i32, %arg1: memref<256x4xbf16, #tpu.memory_space<vmem>>, %arg2: memref<4x128xbf16, #tpu.memory_space<vmem>>, %arg3: memref<256x128xbf16, #tpu.memory_space<vmem>>) attributes {dimension_semantics = [#tpu.dimension_semantics<parallel>], iteration_bounds = array<i64: 1>, scalar_prefetch = 0 : i64, scratch_operands = 0 : i64, tpu.core_type = #tpu.core_type<tc>, window_params = [{transform_indices = @transform_0, window_bounds = array<i64: 256, 4>}, {pipeline_mode = #tpu.pipeline_mode<synchronous>, transform_indices = @transform_1, window_bounds = array<i64: 4, 128>}, {transform_indices = @transform_2, window_bounds = array<i64: 256, 128>}]} {
    %c0 = arith.constant 0 : index
    %c0_0 = arith.constant 0 : index
    %0 = vector.load %arg1[%c0, %c0_0] : memref<256x4xbf16, #tpu.memory_space<vmem>>, vector<256x4xbf16>
    %c0_1 = arith.constant 0 : index
    %c0_2 = arith.constant 0 : index
    %1 = vector.load %arg2[%c0_1, %c0_2] : memref<4x128xbf16, #tpu.memory_space<vmem>>, vector<4x128xbf16>
    %cst = arith.constant dense<0.000000e+00> : vector<256x128xf32>
    %2 = tpu.matmul %0, %1, %cst {dimension_numbers = #tpu.dot_dimension_numbers<[1], [0], [0], [1], [0, 0, 1, 1], [], []>} : vector<256x4xbf16>, vector<4x128xbf16>, vector<256x128xf32> -> vector<256x128xf32>
    %3 = arith.truncf %2 : vector<256x128xf32> to vector<256x128xbf16>
    %c0_3 = arith.constant 0 : index
    %c0_4 = arith.constant 0 : index
    %4 = vector.load %arg3[%c0_3, %c0_4] : memref<256x128xbf16, #tpu.memory_space<vmem>>, vector<256x128xbf16>
    tpu.vector_store %arg3[%c0_3, %c0_4], %3 {strides = array<i32>} : memref<256x128xbf16, #tpu.memory_space<vmem>>, vector<256x128xbf16>,
    return
  }
  func.func @transform_0(%arg0: i32) -> (i32, i32) {
    %c0_i32 = arith.constant 0 : i32
    %c0_i32_0 = arith.constant 0 : i32
    return %arg0, %c0_i32 : i32, i32
  }
  func.func @transform_1(%arg0: i32) -> (i32, i32) {
    %c0_i32 = arith.constant 0 : i32
    %c0_i32_0 = arith.constant 0 : i32
    %c0_i32_1 = arith.constant 0 : i32
    return %c0_i32, %c0_i32_0 : i32, i32
  }
  func.func @transform_2(%arg0: i32) -> (i32, i32) {
    %c0_i32 = arith.constant 0 : i32
    %c0_i32_0 = arith.constant 0 : i32
    return %arg0, %c0_i32 : i32, i32
  }
}

</mosaic_0001>

<llo_original>
// kernel: tpu_custom_call.1
$region0: #{tpu_custom_call.1}
  #allocation0 [shape = 'u32[]', space=smem, size = 0x4, offset = 0x4, fixed_abs, tag = 'smem constant byte address 0x4 - core index']
  #allocation1 [shape = 'u32[72,128]{1,0:T(1,128)}', space=vmem, size = 0x9000, scoped, tag = 'internal scratch']
  %s0 = inlined_call_operand.vmem [shape: bf16[256,4], index: 0, kind: input, shape index: {}]
  %s1 = inlined_call_operand.vmem [shape: bf16[4,128], index: 1, kind: input, shape index: {}]
  %s2 = inlined_call_operand.hbm [shape: bf16[256,128], index: 2, kind: output, shape index: {}]
  %s3 = sld [smem:[#allocation0]]
  $region18: #{tpu_custom_call.1} parent=0
    _
  %s5 = ssub.s32 1, %s3
  %s6 = scalar_select 0, %s5, %s3
  $region1: #{tpu_custom_call.1} parent=0
    #allocation2 [shape = 'u8[65536]{0}', space=vmem, size = 0x10000, scoped, tag = 'output window, operand 0, single buffered']
    #allocation3 [shape = 's32[1]{0}', space=sflag, size = 0x4, scoped, tag = 'scoped memory for tpu_custom_call.1']
    %7 = vsyncpa [#allocation3], 0
    // Predicated region
    $region2: #{tpu_custom_call.1} parent=1 // pred_check
      _
    $region3: #{tpu_custom_call.1} parent=1 // pred_check_branch
      %9 = sbr.rel (0) target = $region5
    $region4: #{tpu_custom_call.1} parent=1 // pred_region
      _
    $region5: #{tpu_custom_call.1} parent=1 // pred_fallthru
      _
    // Predicated region
    $region6: #{tpu_custom_call.1} parent=1 // pred_check
      _
    $region7: #{tpu_custom_call.1} parent=1 // pred_check_branch
      %11 = sbr.rel (0) target = $region9
    $region8: #{tpu_custom_call.1} parent=1 // pred_region
      _
    $region9: #{tpu_custom_call.1} parent=1 // pred_fallthru
      _
    %v13 = vld [vmem:[%s0] sm:$0xf]
    %v14 = vld [vmem:[%s0 + $0x4] sm:$0xf]
    %v15 = vld [vmem:[%s0 + $0x8] sm:$0xf]
    %v16 = vld [vmem:[%s0 + $0xc] sm:$0xf]
    %v17 = vld [vmem:[%s0 + $0x10] sm:$0xf]
    %v18 = vld [vmem:[%s0 + $0x14] sm:$0xf]
    %v19 = vld [vmem:[%s0 + $0x18] sm:$0xf]
    %v20 = vld [vmem:[%s0 + $0x1c] sm:$0xf]
    %v21 = vld [vmem:[%s0 + $0x20] sm:$0xf]
    %v22 = vld [vmem:[%s0 + $0x24] sm:$0xf]
    %v23 = vld [vmem:[%s0 + $0x28] sm:$0xf]
    %v24 = vld [vmem:[%s0 + $0x2c] sm:$0xf]
    %v25 = vld [vmem:[%s0 + $0x30] sm:$0xf]
    %v26 = vld [vmem:[%s0 + $0x34] sm:$0xf]
    %v27 = vld [vmem:[%s0 + $0x38] sm:$0xf]
    %v28 = vld [vmem:[%s0 + $0x3c] sm:$0xf]
    %v29 = vld [vmem:[%s0 + $0x40] sm:$0xf]
    %v30 = vld [vmem:[%s0 + $0x44] sm:$0xf]
    %v31 = vld [vmem:[%s0 + $0x48] sm:$0xf]
    %v32 = vld [vmem:[%s0 + $0x4c] sm:$0xf]
    %v33 = vld [vmem:[%s0 + $0x50] sm:$0xf]
    %v34 = vld [vmem:[%s0 + $0x54] sm:$0xf]
    %v35 = vld [vmem:[%s0 + $0x58] sm:$0xf]
    %v36 = vld [vmem:[%s0 + $0x5c] sm:$0xf]
    %v37 = vld [vmem:[%s0 + $0x60] sm:$0xf]
    %v38 = vld [vmem:[%s0 + $0x64] sm:$0xf]
    %v39 = vld [vmem:[%s0 + $0x68] sm:$0xf]
    %v40 = vld [vmem:[%s0 + $0x6c] sm:$0xf]
    %v41 = vld [vmem:[%s0 + $0x70] sm:$0xf]
    %v42 = vld [vmem:[%s0 + $0x74] sm:$0xf]
    %v43 = vld [vmem:[%s0 + $0x78] sm:$0xf]
    %v44 = vld [vmem:[%s0 + $0x7c] sm:$0xf]
    %v45 = vld [vmem:[%s1] sm:$0x3]
    %v78 = vunpack.c.l.b16 %v13
    %v79 = vunpack.c.l.b16 %v14
    %v80 = vunpack.c.l.b16 %v15
    %v81 = vunpack.c.l.b16 %v16
    %v82 = vunpack.c.l.b16 %v17
    %v83 = vunpack.c.l.b16 %v18
    %v84 = vunpack.c.l.b16 %v19
    %v85 = vunpack.c.l.b16 %v20
    %v86 = vunpack.c.l.b16 %v21
    %v87 = vunpack.c.l.b16 %v22
    %v88 = vunpack.c.l.b16 %v23
    %v89 = vunpack.c.l.b16 %v24
    %v90 = vunpack.c.l.b16 %v25
    %v91 = vunpack.c.l.b16 %v26
    %v92 = vunpack.c.l.b16 %v27
    %v93 = vunpack.c.l.b16 %v28
    %v94 = vunpack.c.l.b16 %v29
    %v95 = vunpack.c.l.b16 %v30
    %v96 = vunpack.c.l.b16 %v31
    %v97 = vunpack.c.l.b16 %v32
    %v98 = vunpack.c.l.b16 %v33
    %v99 = vunpack.c.l.b16 %v34
    %v100 = vunpack.c.l.b16 %v35
    %v101 = vunpack.c.l.b16 %v36
    %v102 = vunpack.c.l.b16 %v37
    %v103 = vunpack.c.l.b16 %v38
    %v104 = vunpack.c.l.b16 %v39
    %v105 = vunpack.c.l.b16 %v40
    %v106 = vunpack.c.l.b16 %v41
    %v107 = vunpack.c.l.b16 %v42
    %v108 = vunpack.c.l.b16 %v43
    %v109 = vunpack.c.l.b16 %v44
    %v110 = vpack.c.b16 %v79, %v78
    %v111 = vpack.c.b16 %v81, %v80
    %v112 = vpack.c.b16 %v83, %v82
    %v113 = vpack.c.b16 %v85, %v84
    %v114 = vpack.c.b16 %v87, %v86
    %v115 = vpack.c.b16 %v89, %v88
    %v116 = vpack.c.b16 %v91, %v90
    %v117 = vpack.c.b16 %v93, %v92
    %v118 = vpack.c.b16 %v95, %v94
    %v119 = vpack.c.b16 %v97, %v96
    %v120 = vpack.c.b16 %v99, %v98
    %v121 = vpack.c.b16 %v101, %v100
    %v122 = vpack.c.b16 %v103, %v102
    %v123 = vpack.c.b16 %v105, %v104
    %v124 = vpack.c.b16 %v107, %v106
    %v125 = vpack.c.b16 %v109, %v108
    %vm126 = vcmask 31744
    %v128 = vsel %vm126, %v110, 0
    %v131 = vsel %vm126, %v111, 0
    %v134 = vsel %vm126, %v112, 0
    %v137 = vsel %vm126, %v113, 0
    %v140 = vsel %vm126, %v114, 0
    %v143 = vsel %vm126, %v115, 0
    %v146 = vsel %vm126, %v116, 0
    %v149 = vsel %vm126, %v117, 0
    %v152 = vsel %vm126, %v118, 0
    %v155 = vsel %vm126, %v119, 0
    %v158 = vsel %vm126, %v120, 0
    %v161 = vsel %vm126, %v121, 0
    %v164 = vsel %vm126, %v122, 0
    %v167 = vsel %vm126, %v123, 0
    %v170 = vsel %vm126, %v124, 0
    %v173 = vsel %vm126, %v125, 0
    %vm175 = vcmask 1041408
    %v177 = vsel %vm175, %v45, 0
    %179 = vmatpush.bf16.msra.mxu0 0
    %180 = vmatpush.bf16.msra.mxu0 0
    %181 = vmatpush.bf16.msra.mxu0 0
    %182 = vmatpush.bf16.msra.mxu0 0
    %183 = vmatpush.bf16.msra.mxu0 0
    %184 = vmatpush.bf16.msra.mxu0 0
    %185 = vmatpush.bf16.msra.mxu0 0
    %186 = vmatpush.bf16.msra.mxu0 %v177
    %187 = vmatmul.bf16.gmra.mxu0 %v128
    %v188 = vpop.f32.mrf.mxu0
    %v189 = vadd.f32 0.0, %v188
    %v190 = vpop.f32.mrf.mxu0
    %v191 = vadd.f32 0.0, %v190
    %192 = vmatmul.bf16.gmra.mxu0 %v131
    %v193 = vpop.f32.mrf.mxu0
    %v194 = vadd.f32 0.0, %v193
    %v195 = vpop.f32.mrf.mxu0
    %v196 = vadd.f32 0.0, %v195
    %197 = vmatmul.bf16.gmra.mxu0 %v134
    %v198 = vpop.f32.mrf.mxu0
    %v199 = vadd.f32 0.0, %v198
    %v200 = vpop.f32.mrf.mxu0
    %v201 = vadd.f32 0.0, %v200
    %202 = vmatmul.bf16.gmra.mxu0 %v137
    %v203 = vpop.f32.mrf.mxu0
    %v204 = vadd.f32 0.0, %v203
    %v205 = vpop.f32.mrf.mxu0
    %v206 = vadd.f32 0.0, %v205
    %207 = vmatmul.bf16.gmra.mxu0 %v140
    %v208 = vpop.f32.mrf.mxu0
    %v209 = vadd.f32 0.0, %v208
    %v210 = vpop.f32.mrf.mxu0
    %v211 = vadd.f32 0.0, %v210
    %212 = vmatmul.bf16.gmra.mxu0 %v143
    %v213 = vpop.f32.mrf.mxu0
    %v214 = vadd.f32 0.0, %v213
    %v215 = vpop.f32.mrf.mxu0
    %v216 = vadd.f32 0.0, %v215
    %217 = vmatmul.bf16.gmra.mxu0 %v146
    %v218 = vpop.f32.mrf.mxu0
    %v219 = vadd.f32 0.0, %v218
    %v220 = vpop.f32.mrf.mxu0
    %v221 = vadd.f32 0.0, %v220
    %222 = vmatmul.bf16.gmra.mxu0 %v149
    %v223 = vpop.f32.mrf.mxu0
    %v224 = vadd.f32 0.0, %v223
    %v225 = vpop.f32.mrf.mxu0
    %v226 = vadd.f32 0.0, %v225
    %227 = vmatmul.bf16.gmra.mxu0 %v152
    %v228 = vpop.f32.mrf.mxu0
    %v229 = vadd.f32 0.0, %v228
    %v230 = vpop.f32.mrf.mxu0
    %v231 = vadd.f32 0.0, %v230
    %232 = vmatmul.bf16.gmra.mxu0 %v155
    %v233 = vpop.f32.mrf.mxu0
    %v234 = vadd.f32 0.0, %v233
    %v235 = vpop.f32.mrf.mxu0
    %v236 = vadd.f32 0.0, %v235
    %237 = vmatmul.bf16.gmra.mxu0 %v158
    %v238 = vpop.f32.mrf.mxu0
    %v239 = vadd.f32 0.0, %v238
    %v240 = vpop.f32.mrf.mxu0
    %v241 = vadd.f32 0.0, %v240
    %242 = vmatmul.bf16.gmra.mxu0 %v161
    %v243 = vpop.f32.mrf.mxu0
    %v244 = vadd.f32 0.0, %v243
    %v245 = vpop.f32.mrf.mxu0
    %v246 = vadd.f32 0.0, %v245
    %247 = vmatmul.bf16.gmra.mxu0 %v164
    %v248 = vpop.f32.mrf.mxu0
    %v249 = vadd.f32 0.0, %v248
    %v250 = vpop.f32.mrf.mxu0
    %v251 = vadd.f32 0.0, %v250
    %252 = vmatmul.bf16.gmra.mxu0 %v167
    %v253 = vpop.f32.mrf.mxu0
    %v254 = vadd.f32 0.0, %v253
    %v255 = vpop.f32.mrf.mxu0
    %v256 = vadd.f32 0.0, %v255
    %257 = vmatmul.bf16.gmra.mxu0 %v170
    %v258 = vpop.f32.mrf.mxu0
    %v259 = vadd.f32 0.0, %v258
    %v260 = vpop.f32.mrf.mxu0
    %v261 = vadd.f32 0.0, %v260
    %262 = vmatmul.bf16.gmra.mxu0 %v173
    %v263 = vpop.f32.mrf.mxu0
    %v264 = vadd.f32 0.0, %v263
    %v265 = vpop.f32.mrf.mxu0
    %v266 = vadd.f32 0.0, %v265
    %267 = vdwg.mxu0
    %v268 = vpack.c.bf16 %v189, %v189
    %v269 = vpack.c.bf16 %v191, %v191
    %v270 = vpack.c.bf16 %v194, %v194
    %v271 = vpack.c.bf16 %v196, %v196
    %v272 = vpack.c.bf16 %v199, %v199
    %v273 = vpack.c.bf16 %v201, %v201
    %v274 = vpack.c.bf16 %v204, %v204
    %v275 = vpack.c.bf16 %v206, %v206
    %v276 = vpack.c.bf16 %v209, %v209
    %v277 = vpack.c.bf16 %v211, %v211
    %v278 = vpack.c.bf16 %v214, %v214
    %v279 = vpack.c.bf16 %v216, %v216
    %v280 = vpack.c.bf16 %v219, %v219
    %v281 = vpack.c.bf16 %v221, %v221
    %v282 = vpack.c.bf16 %v224, %v224
    %v283 = vpack.c.bf16 %v226, %v226
    %v284 = vpack.c.bf16 %v229, %v229
    %v285 = vpack.c.bf16 %v231, %v231
    %v286 = vpack.c.bf16 %v234, %v234
    %v287 = vpack.c.bf16 %v236, %v236
    %v288 = vpack.c.bf16 %v239, %v239
    %v289 = vpack.c.bf16 %v241, %v241
    %v290 = vpack.c.bf16 %v244, %v244
    %v291 = vpack.c.bf16 %v246, %v246
    %v292 = vpack.c.bf16 %v249, %v249
    %v293 = vpack.c.bf16 %v251, %v251
    %v294 = vpack.c.bf16 %v254, %v254
    %v295 = vpack.c.bf16 %v256, %v256
    %v296 = vpack.c.bf16 %v259, %v259
    %v297 = vpack.c.bf16 %v261, %v261
    %v298 = vpack.c.bf16 %v264, %v264
    %v299 = vpack.c.bf16 %v266, %v266
    %300 = vst [vmem:[#allocation2] sm:$0xf] %v268
    %301 = vst [vmem:[#allocation2 + $0x4] sm:$0xf] %v269
    %302 = vst [vmem:[#allocation2 + $0x8] sm:$0xf] %v270
    %303 = vst [vmem:[#allocation2 + $0xc] sm:$0xf] %v271
    %304 = vst [vmem:[#allocation2 + $0x10] sm:$0xf] %v272
    %305 = vst [vmem:[#allocation2 + $0x14] sm:$0xf] %v273
    %306 = vst [vmem:[#allocation2 + $0x18] sm:$0xf] %v274
    %307 = vst [vmem:[#allocation2 + $0x1c] sm:$0xf] %v275
    %308 = vst [vmem:[#allocation2 + $0x20] sm:$0xf] %v276
    %309 = vst [vmem:[#allocation2 + $0x24] sm:$0xf] %v277
    %310 = vst [vmem:[#allocation2 + $0x28] sm:$0xf] %v278
    %311 = vst [vmem:[#allocation2 + $0x2c] sm:$0xf] %v279
    %312 = vst [vmem:[#allocation2 + $0x30] sm:$0xf] %v280
    %313 = vst [vmem:[#allocation2 + $0x34] sm:$0xf] %v281
    %314 = vst [vmem:[#allocation2 + $0x38] sm:$0xf] %v282
    %315 = vst [vmem:[#allocation2 + $0x3c] sm:$0xf] %v283
    %316 = vst [vmem:[#allocation2 + $0x40] sm:$0xf] %v284
    %317 = vst [vmem:[#allocation2 + $0x44] sm:$0xf] %v285
    %318 = vst [vmem:[#allocation2 + $0x48] sm:$0xf] %v286
    %319 = vst [vmem:[#allocation2 + $0x4c] sm:$0xf] %v287
    %320 = vst [vmem:[#allocation2 + $0x50] sm:$0xf] %v288
    %321 = vst [vmem:[#allocation2 + $0x54] sm:$0xf] %v289
    %322 = vst [vmem:[#allocation2 + $0x58] sm:$0xf] %v290
    %323 = vst [vmem:[#allocation2 + $0x5c] sm:$0xf] %v291
    %324 = vst [vmem:[#allocation2 + $0x60] sm:$0xf] %v292
    %325 = vst [vmem:[#allocation2 + $0x64] sm:$0xf] %v293
    %326 = vst [vmem:[#allocation2 + $0x68] sm:$0xf] %v294
    %327 = vst [vmem:[#allocation2 + $0x6c] sm:$0xf] %v295
    %328 = vst [vmem:[#allocation2 + $0x70] sm:$0xf] %v296
    %329 = vst [vmem:[#allocation2 + $0x74] sm:$0xf] %v297
    %330 = vst [vmem:[#allocation2 + $0x78] sm:$0xf] %v298
    %331 = vst [vmem:[#allocation2 + $0x7c] sm:$0xf] %v299
    // Predicated region
    $region10: #{tpu_custom_call.1} parent=1 // pred_check
      _
    $region11: #{tpu_custom_call.1} parent=1 // pred_check_branch
      %333 = sbr.rel (0) target = $region13
    $region12: #{tpu_custom_call.1} parent=1 // pred_region
      %335 = vsyncadd [#allocation3], 0
      %s336 = sshll.u32 [#allocation2], 4
      %s337 = int_to_ptr.vmem [resolvable:$true] %s336
      %s338 = sshll.u32 %s2, 4
      %s339 = int_to_ptr.hbm [resolvable:$true] %s338
      %344 = dma.vmem_to_hbm [thread:$0]  %s337, 2048, %s339, [#allocation3], 64, 64, 4
    $region13: #{tpu_custom_call.1} parent=1 // pred_fallthru
      _
    // Predicated region
    $region14: #{tpu_custom_call.1} parent=1 // pred_check
      _
    $region15: #{tpu_custom_call.1} parent=1 // pred_check_branch
      %346 = sbr.rel (0) target = $region17
    $region16: #{tpu_custom_call.1} parent=1 // pred_region
      %348 = dma.done [#allocation3], 2048
    $region17: #{tpu_custom_call.1} parent=1 // pred_fallthru
      _
    %349 = vsyncpa [#allocation3], 1

</llo_original>
